<compile_context>
chip_gen: v7x
topology: tpu7x:2x2x1
jax: 0.10.0
libtpu: 0.0.40
codegen_flags: <defaults>
</compile_context>

<pallas_src>
import jax
import jax.numpy as jnp
from jax.experimental import pallas as pl
from jax.experimental.pallas import tpu as pltpu


def _weight_mask_kernel(x_ref, m_ref, o_ref):
    # Elementwise hot path. Widen the mask in-register: the VPU cast rides in
    # free slack of a 3-stream HBM-bound kernel (on v5e Mosaic widens narrow
    # dtypes internally anyway), so narrow mask storage is pure bandwidth win.
    x = x_ref[...]
    m = m_ref[...].astype(x.dtype)
    o_ref[...] = x * m


def _sublane_unit(*dtypes) -> int:
    """Conservative row-tile granule covering every stream's packed layout."""
    unit = 8
    for dt in dtypes:
        unit = max(unit, {4: 8, 2: 16, 1: 32}.get(jnp.dtype(dt).itemsize, 8))
    return unit


def _choose_block_rows(rows: int, target_rows: int, min_good_rows: int, unit: int) -> int:
    """Pick the row-tile size.

    Preference order: >=2 grid steps (v7x 2-TC sharding), tile big enough to
    sit on the HBM-bandwidth plateau, even small grids (TC load balance),
    exact divisors of `rows` (no ragged tail block), then largest tile.
    A whole-array block (br == rows) is always layout-legal as the fallback.
    """
    target_rows = max(unit, (target_rows // unit) * unit)
    min_good_rows = max(unit, (min_good_rows // unit) * unit)

    candidates = [(rows, 1, True)]  # whole-array block: exempt from (8,128) rule
    # Exact unit-multiple divisors of rows (no ragged tail).
    hi = min(rows, target_rows)
    d = unit
    while d <= hi:
        if rows % d == 0:
            candidates.append((d, rows // d, True))
        d += unit
    # Ragged fallbacks: target-size tile, and ~half the rows (2 near-even tiles).
    half = -(-(rows // 2) // unit) * unit  # ceil(rows/2) to a unit multiple
    for d in {target_rows, half}:
        if unit <= d < rows:
            candidates.append((d, -(-rows // d), False))

    def score(c):
        d, g, exact = c
        return (
            g >= 2,                           # feed both v7x TensorCores
            d >= min_good_rows or d == rows,  # stay on the tiling plateau
            (g % 2 == 0) or (g >= 8),         # balanced split across 2 TCs
            exact,                            # avoid ragged tail block
            d,                                # then biggest tile (fewest steps)
        )

    return max(candidates, key=score)[0]


def weight_mask(
    x: jax.Array,
    w_mask: jax.Array,
    *,
    target_set_bytes: int = 12 << 20,   # x + mask + out tile bytes (x2 buffered)
    min_kernel_elems: int = 1 << 16,
) -> jax.Array:
    """Pallas implementation of WeightMask.forward: X * W_mask (same shape)."""
    assert x.shape == w_mask.shape, "W_mask is registered with the same shape as X"
    orig_shape = x.shape
    total = x.size

    # i1 vectors are fragile in Mosaic; carry bool masks as int8 (keeps the
    # 1-byte HBM bandwidth saving and a clean VPU widen path on all chips).
    if w_mask.dtype == jnp.bool_:
        w_mask = w_mask.astype(jnp.int8)

    # Widest lane count (multiple of 128) that divides the flat element count.
    lane = None
    for cand in (1024, 512, 256, 128):
        if total % cand == 0:
            lane = cand
            break

    # Small-tensor / ragged fallback: XLA's fused elementwise multiply wins
    # below kernel fixed cost or when no lane-dense factorization exists.
    if lane is None or total < min_kernel_elems:
        return (x * w_mask.astype(x.dtype)).astype(x.dtype)

    rows = total // lane
    x_item = jnp.dtype(x.dtype).itemsize
    m_item = jnp.dtype(w_mask.dtype).itemsize
    unit = _sublane_unit(x.dtype, w_mask.dtype)

    # Keep bytes-per-tile roughly constant regardless of the lane factor:
    # per-set working bytes = lane * (x + out + mask) per row.
    per_row_bytes = lane * (2 * x_item + m_item)
    target_rows = max(unit, int(target_set_bytes) // per_row_bytes)
    min_good_rows = max(unit, target_rows // 4)   # ~plateau knee (~1 MiB / x-stream)
    br = _choose_block_rows(rows, target_rows, min_good_rows, unit)
    grid = (pl.cdiv(rows, br),)

    # NOTE: x / w_mask are assumed contiguous row-major, so these reshapes are
    # free metadata moves; a transposed input would force an extra HBM copy.
    x2 = x.reshape(rows, lane)
    m2 = w_mask.reshape(rows, lane)   # keep stored (possibly narrow) dtype; widen in-kernel

    blk = pl.BlockSpec((br, lane), lambda i: (i, 0))
    cost = pl.CostEstimate(
        flops=total,                                   # one multiply per element
        transcendentals=0,
        bytes_accessed=total * (2 * x_item + m_item),  # x + mask + out streams
    )

    out = pl.pallas_call(
        _weight_mask_kernel,
        out_shape=jax.ShapeDtypeStruct((rows, lane), x.dtype),
        grid_spec=pltpu.PrefetchScalarGridSpec(
            num_scalar_prefetch=0,
            grid=grid,
            in_specs=[blk, blk],
            out_specs=blk,
        ),
        compiler_params=pltpu.CompilerParams(
            # Independent row-tiles: shard across the 2 TCs on v7x (neutral on
            # single-TC v5e/v6e).
            dimension_semantics=("parallel",),
            # Raise scoped VMEM above v5e's 16 MiB default; <=48 MiB keeps
            # headroom under v7x's 64 MiB physical VMEM.
            vmem_limit_bytes=48 << 20,
        ),
        cost_estimate=cost,
    )(x2, m2)
    return out.reshape(orig_shape)


# TODO(synk): nn.utils.parametrize registration / buffer plumbing is framework-side;
# only the forward X * W_mask is implemented as a kernel.


if __name__ == "__main__":
    key = jax.random.PRNGKey(0)
    kx, km = jax.random.split(key)

    # Small conv-weight-like tensor: (N=2, C=4, H=16, W=16)
    x = jax.random.normal(kx, (2, 4, 16, 16), dtype=jnp.float32)
    # Deterministic binary mask buffer (as would be registered in __init__).
    w_mask = (jax.random.uniform(km, (2, 4, 16, 16)) > 0.5).astype(jnp.float32)

    # Force the Pallas path even at this tiny demo size (min_kernel_elems=0).
    y = weight_mask(x, w_mask, min_kernel_elems=0)
    jax.block_until_ready(y)
    ref = x * w_mask
    assert jnp.allclose(y, ref), "mismatch vs reference (f32 mask)"

    # Narrow mask buffer (recommended caller contract): bf16, widened in-kernel.
    w_mask_bf16 = w_mask.astype(jnp.bfloat16)
    y2 = weight_mask(x, w_mask_bf16, min_kernel_elems=0)
    jax.block_until_ready(y2)
    ref2 = x * w_mask_bf16.astype(jnp.float32)
    assert jnp.allclose(y2, ref2), "mismatch vs reference (bf16 mask)"

    # Bool mask: wrapper carries it as int8 into the kernel.
    y3 = weight_mask(x, w_mask.astype(jnp.bool_), min_kernel_elems=0)
    jax.block_until_ready(y3)
    assert jnp.allclose(y3, ref), "mismatch vs reference (bool mask)"

    print("KERNEL_OK")
</pallas_src>

<mosaic_0001>
module attributes {stable_mosaic.version = 11 : i64} {
  func.func @_weight_mask_kernel(%arg0: i32, %arg1: memref<2x1024xf32, #tpu.memory_space<vmem>>, %arg2: memref<2x1024xf32, #tpu.memory_space<vmem>>, %arg3: memref<2x1024xf32, #tpu.memory_space<vmem>>) attributes {dimension_semantics = [#tpu.dimension_semantics<parallel>], iteration_bounds = array<i64: 1>, scalar_prefetch = 0 : i64, scratch_operands = 0 : i64, tpu.core_type = #tpu.core_type<tc>, window_params = [{transform_indices = @transform_0, window_bounds = array<i64: 2, 1024>}, {transform_indices = @transform_1, window_bounds = array<i64: 2, 1024>}, {transform_indices = @transform_2, window_bounds = array<i64: 2, 1024>}]} {
    %c0 = arith.constant 0 : index
    %c0_0 = arith.constant 0 : index
    %0 = vector.load %arg1[%c0, %c0_0] : memref<2x1024xf32, #tpu.memory_space<vmem>>, vector<2x1024xf32>
    %c0_1 = arith.constant 0 : index
    %c0_2 = arith.constant 0 : index
    %1 = vector.load %arg2[%c0_1, %c0_2] : memref<2x1024xf32, #tpu.memory_space<vmem>>, vector<2x1024xf32>
    %2 = arith.mulf %0, %1 : vector<2x1024xf32>
    %c0_3 = arith.constant 0 : index
    %c0_4 = arith.constant 0 : index
    %3 = vector.load %arg3[%c0_3, %c0_4] : memref<2x1024xf32, #tpu.memory_space<vmem>>, vector<2x1024xf32>
    tpu.vector_store %arg3[%c0_3, %c0_4], %2 {strides = array<i32>} : memref<2x1024xf32, #tpu.memory_space<vmem>>, vector<2x1024xf32>,
    return
  }
  func.func @transform_0(%arg0: i32) -> (i32, i32) {
    %c0_i32 = arith.constant 0 : i32
    %c0_i32_0 = arith.constant 0 : i32
    return %arg0, %c0_i32 : i32, i32
  }
  func.func @transform_1(%arg0: i32) -> (i32, i32) {
    %c0_i32 = arith.constant 0 : i32
    %c0_i32_0 = arith.constant 0 : i32
    return %arg0, %c0_i32 : i32, i32
  }
  func.func @transform_2(%arg0: i32) -> (i32, i32) {
    %c0_i32 = arith.constant 0 : i32
    %c0_i32_0 = arith.constant 0 : i32
    return %arg0, %c0_i32 : i32, i32
  }
}

</mosaic_0001>

<llo_original>
// kernel: tpu_custom_call.1
$region0: #{tpu_custom_call.1}
  #allocation0 [shape = 'u32[]', space=smem, size = 0x4, offset = 0x4, fixed_abs, tag = 'smem constant byte address 0x4 - core index']
  #allocation1 [shape = 'u32[144,128]{1,0:T(1,128)}', space=vmem, size = 0x12000, scoped, tag = 'internal scratch']
  %s0 = inlined_call_operand.hbm [shape: f32[2,1024], index: 0, kind: input, shape index: {}]
  %s1 = inlined_call_operand.hbm [shape: f32[2,1024], index: 1, kind: input, shape index: {}]
  %s2 = inlined_call_operand.hbm [shape: f32[2,1024], index: 2, kind: output, shape index: {}]
  %s3 = sld [smem:[#allocation0]]
  $region26: #{tpu_custom_call.1} parent=0
    _
  %s5 = ssub.s32 1, %s3
  %s6 = scalar_select 0, %s5, %s3
  $region1: #{tpu_custom_call.1} parent=0
    #allocation2 [shape = 'u8[8192]{0}', space=vmem, size = 0x2000, scoped, tag = 'input window, operand 0, single buffered']
    #allocation3 [shape = 's32[1]{0}', space=sflag, size = 0x4, scoped, tag = 'scoped memory for tpu_custom_call.1']
    #allocation4 [shape = 's32[1]{0}', space=sflag, size = 0x4, scoped, tag = 'scoped memory for tpu_custom_call.1']
    #allocation5 [shape = 'u8[8192]{0}', space=vmem, size = 0x2000, scoped, tag = 'input window, operand 1, single buffered']
    #allocation6 [shape = 's32[1]{0}', space=sflag, size = 0x4, scoped, tag = 'scoped memory for tpu_custom_call.1']
    #allocation7 [shape = 'u8[8192]{0}', space=vmem, size = 0x2000, scoped, tag = 'output window, operand 0, single buffered']
    %7 = vsyncpa [#allocation3], 0
    %8 = vsyncpa [#allocation6], 0
    %9 = vsyncpa [#allocation4], 0
    // Predicated region
    $region2: #{tpu_custom_call.1} parent=1 // pred_check
      _
    $region3: #{tpu_custom_call.1} parent=1 // pred_check_branch
      %11 = sbr.rel (0) target = $region5
    $region4: #{tpu_custom_call.1} parent=1 // pred_region
      %s13 = ssub.s32 256, 256
      %14 = vsyncadd [#allocation3], %s13
      %s16 = sshll.u32 [#allocation2], 4
      %s17 = int_to_ptr.vmem [resolvable:$true] %s16
      %19 = dma.hbm_to_vmem [thread:$0]  %s0, 256, %s17, [#allocation3]
    $region5: #{tpu_custom_call.1} parent=1 // pred_fallthru
      _
    // Predicated region
    $region6: #{tpu_custom_call.1} parent=1 // pred_check
      _
    $region7: #{tpu_custom_call.1} parent=1 // pred_check_branch
      %21 = sbr.rel (0) target = $region9
    $region8: #{tpu_custom_call.1} parent=1 // pred_region
      %s23 = ssub.s32 256, 256
      %24 = vsyncadd [#allocation6], %s23
      %s26 = sshll.u32 [#allocation5], 4
      %s27 = int_to_ptr.vmem [resolvable:$true] %s26
      %29 = dma.hbm_to_vmem [thread:$0]  %s1, 256, %s27, [#allocation6]
    $region9: #{tpu_custom_call.1} parent=1 // pred_fallthru
      _
    // Predicated region
    $region10: #{tpu_custom_call.1} parent=1 // pred_check
      _
    $region11: #{tpu_custom_call.1} parent=1 // pred_check_branch
      %31 = sbr.rel (0) target = $region13
    $region12: #{tpu_custom_call.1} parent=1 // pred_region
      %32 = dma.done [#allocation3], 256
    $region13: #{tpu_custom_call.1} parent=1 // pred_fallthru
      _
    // Predicated region
    $region14: #{tpu_custom_call.1} parent=1 // pred_check
      _
    $region15: #{tpu_custom_call.1} parent=1 // pred_check_branch
      %34 = sbr.rel (0) target = $region17
    $region16: #{tpu_custom_call.1} parent=1 // pred_region
      %35 = dma.done [#allocation6], 256
    $region17: #{tpu_custom_call.1} parent=1 // pred_fallthru
      _
    %v36 = vld [vmem:[#allocation2] sm:$0xff]
    %v37 = vld [vmem:[#allocation2 + $0x8] sm:$0xff]
    %v38 = vld [vmem:[#allocation5] sm:$0xff]
    %v39 = vld [vmem:[#allocation5 + $0x8] sm:$0xff]
    %v40 = vmul.f32 %v36, %v38
    %v41 = vmul.f32 %v37, %v39
    %42 = vst [vmem:[#allocation7] sm:$0xff] %v40
    %43 = vst [vmem:[#allocation7 + $0x8] sm:$0xff] %v41
    // Predicated region
    $region18: #{tpu_custom_call.1} parent=1 // pred_check
      _
    $region19: #{tpu_custom_call.1} parent=1 // pred_check_branch
      %45 = sbr.rel (0) target = $region21
    $region20: #{tpu_custom_call.1} parent=1 // pred_region
      %s47 = ssub.s32 256, 256
      %48 = vsyncadd [#allocation4], %s47
      %s50 = sshll.u32 [#allocation7], 4
      %s51 = int_to_ptr.vmem [resolvable:$true] %s50
      %53 = dma.vmem_to_hbm [thread:$0]  %s51, 256, %s2, [#allocation4]
    $region21: #{tpu_custom_call.1} parent=1 // pred_fallthru
      _
    // Predicated region
    $region22: #{tpu_custom_call.1} parent=1 // pred_check
      _
    $region23: #{tpu_custom_call.1} parent=1 // pred_check_branch
      %55 = sbr.rel (0) target = $region25
    $region24: #{tpu_custom_call.1} parent=1 // pred_region
      %56 = dma.done [#allocation4], 256
    $region25: #{tpu_custom_call.1} parent=1 // pred_fallthru
      _
    %57 = vsyncpa [#allocation3], 1
    %58 = vsyncpa [#allocation6], 1
    %59 = vsyncpa [#allocation4], 1

</llo_original>
